<compile_context>
chip_gen: v7x
topology: tpu7x:2x2x1
jax: 0.10.0
libtpu: 0.0.40
codegen_flags: <defaults>
</compile_context>

<pallas_src>
import functools

import jax
import jax.numpy as jnp
from jax import lax
from jax.experimental import pallas as pl
from jax.experimental.pallas import tpu as pltpu

_VMEM = pltpu.MemorySpace.VMEM
_VMEM_LIMIT = 32 * 1024 * 1024


def _round_up(x, m):
    return ((x + m - 1) // m) * m


# ----------------------------------------------------------------------------
# Pallas kernels
# ----------------------------------------------------------------------------
def _conv_kernel(planes_ref, w_ref, bias_ref, *refs, kh, kw, stride, oh, ow, ow_pad,
                 cin, cout, leaky, slope, with_stats):
    """Direct conv for one batch element: in-VMEM window gather + MXU matmul.

    refs = (out_ref[, ssum_ref, ssq_ref], acc_ref).  acc_ref is an f32 VMEM scratch
    accumulator of shape (oh*ow_pad, cout); BN statistics are fused into the epilogue.
    """
    acc_ref = refs[-1]
    out_ref = refs[0]
    r_pad = oh * ow_pad

    acc_ref[...] = jnp.zeros_like(acc_ref)
    for i in range(kh):
        for j in range(kw):
            if stride == 2:
                p, pi, pj = (i % 2) * 2 + (j % 2), i // 2, j // 2
            else:
                p, pi, pj = 0, i, j
            win = planes_ref[p, pl.ds(pi, oh), pl.ds(pj, ow_pad), :]   # (oh, ow_pad, cin)
            a = jnp.reshape(win, (r_pad, cin))                         # aligned merge
            w_ij = w_ref[i * kw + j]                                   # (cin, cout)
            if cin < 8:
                # tiny-channel first layer: VPU outer products instead of K<8 MXU dots
                a32 = a.astype(jnp.float32)
                w32 = w_ij.astype(jnp.float32)
                for c in range(cin):
                    acc_ref[...] += a32[:, c:c + 1] * w32[c:c + 1, :]
            else:
                acc_ref[...] += jnp.dot(a, w_ij, preferred_element_type=jnp.float32)

    res = acc_ref[...] + bias_ref[...]                                 # (r_pad, cout) f32

    if with_stats:
        if ow_pad != ow:
            col_id = lax.broadcasted_iota(jnp.int32, (oh, ow_pad, 1), 1)
            mask = jnp.reshape((col_id < ow).astype(jnp.float32), (r_pad, 1))
            resm = res * mask
        else:
            resm = res
        refs[1][...] = jnp.sum(resm, axis=0, keepdims=True)            # (1, cout)
        refs[2][...] = jnp.sum(resm * res, axis=0, keepdims=True)      # (1, cout)

    if leaky:
        res = jnp.where(res >= 0.0, res, slope * res)
    out_ref[...] = res.astype(out_ref.dtype)


def _bn_apply_kernel(x_ref, scale_ref, shift_ref, o_ref, *, slope):
    """y = x*scale + shift, LeakyReLU, bf16 output. Blocks: (1, tr, C) x (1, 1, C)."""
    y = x_ref[...].astype(jnp.float32) * scale_ref[...] + shift_ref[...]
    o_ref[...] = jnp.where(y >= 0.0, y, slope * y).astype(o_ref.dtype)


def _rec_colsum_kernel(x_ref, xr_ref, rec_ref, col_ref):
    """Fused, row-tiled: per-batch sum |x - xrec| and per-(b, w) column sum of x."""
    @pl.when(pl.program_id(1) == 0)
    def _():
        rec_ref[...] = jnp.zeros_like(rec_ref)
        col_ref[...] = jnp.zeros_like(col_ref)
    x = x_ref[...]                                       # (1, tr, w) f32
    d = jnp.abs(x - xr_ref[...])
    rec_ref[...] += jnp.reshape(jnp.sum(d), (1, 1, 1))
    col_ref[...] += jnp.sum(x, axis=1, keepdims=True)    # (1, 1, w)


def _mask_kernel(len_ref, xr_ref, o_ref, *, pad_val):
    """reconstructions * x_mask + (1 - x_mask) * pad_val; mask[b, w] = w < length[b]."""
    bi = pl.program_id(0)
    x = xr_ref[...]                                      # (1, c, h, w) f32
    length = len_ref[bi]
    col = lax.broadcasted_iota(jnp.int32, x.shape, 3)
    mask = (col < length).astype(jnp.float32)
    o_ref[...] = (x * mask + (1.0 - mask) * pad_val).astype(o_ref.dtype)


def _kl_kernel(mean_ref, logvar_ref, o_ref):
    """DiagonalGaussian KL vs N(0,1), summed over dims (1,2,3) per batch element."""
    m = mean_ref[...]
    lv = logvar_ref[...]
    kl = 0.5 * jnp.sum(m * m + jnp.exp(lv) - 1.0 - lv, axis=(1, 2, 3))
    o_ref[...] = jnp.reshape(kl, (o_ref.shape[0], 1))


# ----------------------------------------------------------------------------
# Pallas wrappers
# ----------------------------------------------------------------------------
def conv2d_pallas(x_nhwc, w, bias, *, stride, leaky=False, with_stats=False,
                  out_dtype=jnp.bfloat16, slope=0.2, pad=1):
    """4x4 conv (stride 1/2, pad 1) on NHWC input via a direct Pallas kernel.

    Returns (out (n, oh*ow_pad, cout), oh, ow, ow_pad, stats|None) where stats is
    (sum, sumsq) per batch element of shape (n, 1, cout), masked to valid columns.
    """
    n, H, W, C = x_nhwc.shape
    cout, cin, kh, kw = w.shape
    assert cin == C and stride in (1, 2)

    oh = (H + 2 * pad - kh) // stride + 1
    ow = (W + 2 * pad - kw) // stride + 1
    ow_pad = _round_up(ow, 16)          # keep the in-kernel row merge layout-trivial
    r_pad = oh * ow_pad

    xp = jnp.pad(x_nhwc.astype(jnp.bfloat16), ((0, 0), (pad, pad), (pad, pad), (0, 0)))
    Hp, Wp = H + 2 * pad, W + 2 * pad

    if stride == 2:
        max_pi, max_pj = (kh - 1) // 2, (kw - 1) // 2
        Hh = max(_round_up(Hp, 2) // 2, max_pi + oh)
        Wh = max(_round_up(Wp, 2) // 2, max_pj + ow_pad)
        xp = jnp.pad(xp, ((0, 0), (0, 2 * Hh - Hp), (0, 2 * Wh - Wp), (0, 0)))
        # split into the 4 stride-phase planes (single cheap space-to-depth pass)
        planes = jnp.reshape(
            jnp.transpose(jnp.reshape(xp, (n, Hh, 2, Wh, 2, C)), (0, 2, 4, 1, 3, 5)),
            (n, 4, Hh, Wh, C))
        P = 4
    else:
        max_pi, max_pj = kh - 1, kw - 1
        Hh = max(Hp, max_pi + oh)
        Wh = max(Wp, max_pj + ow_pad)
        xp = jnp.pad(xp, ((0, 0), (0, Hh - Hp), (0, Wh - Wp), (0, 0)))
        planes = xp[:, None]
        P = 1

    wmat = jnp.reshape(jnp.transpose(w, (2, 3, 1, 0)), (kh * kw, C, cout)).astype(jnp.bfloat16)
    if bias is None:
        bias = jnp.zeros((cout,), jnp.float32)
    bias_arr = jnp.reshape(bias.astype(jnp.float32), (1, cout))

    out_shapes = [jax.ShapeDtypeStruct((n, r_pad, cout), out_dtype)]
    out_specs = [pl.BlockSpec((None, r_pad, cout), lambda b: (b, 0, 0))]
    if with_stats:
        out_shapes += [jax.ShapeDtypeStruct((n, 1, cout), jnp.float32)] * 2
        out_specs += [pl.BlockSpec((None, 1, cout), lambda b: (b, 0, 0)),
                      pl.BlockSpec((None, 1, cout), lambda b: (b, 0, 0))]

    kernel = functools.partial(
        _conv_kernel, kh=kh, kw=kw, stride=stride, oh=oh, ow=ow, ow_pad=ow_pad,
        cin=C, cout=cout, leaky=leaky, slope=slope, with_stats=with_stats)

    # TODO(synk): very large per-image spatial slabs would need an H-tiled (halo)
    # variant; a full per-batch-element slab is kept resident in VMEM here.
    outs = pl.pallas_call(
        kernel,
        out_shape=tuple(out_shapes),
        grid_spec=pltpu.PrefetchScalarGridSpec(
            num_scalar_prefetch=0,
            grid=(n,),
            in_specs=[pl.BlockSpec((None, P, Hh, Wh, C), lambda b: (b, 0, 0, 0, 0)),
                      pl.BlockSpec((kh * kw, C, cout), lambda b: (0, 0, 0)),
                      pl.BlockSpec((1, cout), lambda b: (0, 0))],
            out_specs=tuple(out_specs),
            scratch_shapes=[pltpu.VMEM((r_pad, cout), jnp.float32)]),
        compiler_params=pltpu.CompilerParams(
            dimension_semantics=("parallel",),
            vmem_limit_bytes=_VMEM_LIMIT),
    )(planes, wmat, bias_arr)

    if with_stats:
        out, ssum, ssq = outs
        return out, oh, ow, ow_pad, (ssum, ssq)
    (out,) = outs
    return out, oh, ow, ow_pad, None


def bn_lrelu_apply(x_groups, scale, shift, *, slope=0.2, tr=1024):
    """Row-tiled y = x*scale + shift + LeakyReLU over (G, rows, C); per-group params."""
    G, rows, C = x_groups.shape
    tr_eff = min(tr, _round_up(rows, 8))
    rows_p = _round_up(rows, tr_eff)
    x_p = x_groups if rows_p == rows else jnp.pad(x_groups, ((0, 0), (0, rows_p - rows), (0, 0)))
    out = pl.pallas_call(
        functools.partial(_bn_apply_kernel, slope=slope),
        out_shape=jax.ShapeDtypeStruct((G, rows_p, C), jnp.bfloat16),
        grid_spec=pltpu.PrefetchScalarGridSpec(
            num_scalar_prefetch=0, grid=(G, rows_p // tr_eff),
            in_specs=[pl.BlockSpec((1, tr_eff, C), lambda g, t: (g, t, 0)),
                      pl.BlockSpec((1, 1, C), lambda g, t: (g, 0, 0)),
                      pl.BlockSpec((1, 1, C), lambda g, t: (g, 0, 0))],
            out_specs=pl.BlockSpec((1, tr_eff, C), lambda g, t: (g, t, 0))),
        compiler_params=pltpu.CompilerParams(
            dimension_semantics=("parallel", "parallel"),
            vmem_limit_bytes=_VMEM_LIMIT),
    )(x_p, scale, shift)
    return out[:, :rows]


# ----------------------------------------------------------------------------
# NLayerDiscriminator (PatchGAN) with weights_init semantics, channel-last
# ----------------------------------------------------------------------------
def init_nlayer_discriminator_params(key, input_nc=3, ndf=64, n_layers=3, kw=4):
    chans = [(input_nc, ndf)]
    nf_mult = 1
    for n in range(1, n_layers):
        prev = nf_mult
        nf_mult = min(2 ** n, 8)
        chans.append((ndf * prev, ndf * nf_mult))
    prev = nf_mult
    nf_mult = min(2 ** n_layers, 8)
    chans.append((ndf * prev, ndf * nf_mult))
    chans.append((ndf * nf_mult, 1))

    keys = jax.random.split(key, 2 * len(chans))
    convs, norms = [], []
    for idx, (cin, cout) in enumerate(chans):
        wkey, nkey = keys[2 * idx], keys[2 * idx + 1]
        weight = 0.02 * jax.random.normal(wkey, (cout, cin, kw, kw), jnp.float32)  # normal(0, 0.02)
        has_bias = (idx == 0) or (idx == len(chans) - 1)  # norm-followed convs use bias=False
        bias = jnp.zeros((cout,), jnp.float32) if has_bias else None
        stride = 2 if idx < n_layers else 1
        convs.append({"w": weight, "b": bias, "stride": stride})
        if 0 < idx < len(chans) - 1:
            norms.append({"gamma": 1.0 + 0.02 * jax.random.normal(nkey, (cout,), jnp.float32),
                          "beta": jnp.zeros((cout,), jnp.float32)})
        else:
            norms.append(None)
    return {"convs": convs, "norms": norms}


def nlayer_discriminator(x_nhwc, params, *, num_streams=1):
    """x_nhwc: (n, h, w, c) channel-last input; per-stream BatchNorm statistics.

    num_streams=2 lets real/fake share one pass while keeping the PyTorch
    per-forward BatchNorm semantics.
    """
    convs, norms = params["convs"], params["norms"]
    n = x_nhwc.shape[0]
    assert n % num_streams == 0
    per = n // num_streams
    h = x_nhwc.astype(jnp.bfloat16)
    for idx, conv in enumerate(convs):
        cout = conv["w"].shape[0]
        is_last = idx == len(convs) - 1
        out, oh, ow, ow_pad, stats = conv2d_pallas(
            h, conv["w"], conv["b"], stride=conv["stride"],
            leaky=(idx == 0), with_stats=(norms[idx] is not None),
            out_dtype=jnp.float32 if is_last else jnp.bfloat16)
        r_pad = oh * ow_pad
        if norms[idx] is not None:
            ssum, ssq = stats                                  # (n, 1, cout) each
            g_sum = jnp.sum(jnp.reshape(ssum, (num_streams, per, cout)), axis=1)
            g_sq = jnp.sum(jnp.reshape(ssq, (num_streams, per, cout)), axis=1)
            count = float(per * oh * ow)
            mean = g_sum / count
            var = jnp.maximum(g_sq / count - mean * mean, 0.0)     # biased batch var
            scale = jnp.reshape(norms[idx]["gamma"], (1, cout)) * lax.rsqrt(var + 1e-5)
            shift = jnp.reshape(norms[idx]["beta"], (1, cout)) - mean * scale
            grouped = jnp.reshape(out, (num_streams, per * r_pad, cout))
            grouped = bn_lrelu_apply(grouped, scale[:, None, :], shift[:, None, :])
            out = jnp.reshape(grouped, (n, r_pad, cout))
        h = jnp.reshape(out, (n, oh, ow_pad, cout))[:, :, :ow, :]   # drop padded columns
    return h   # (n, oh_f, ow_f, 1) f32 logits


# ----------------------------------------------------------------------------
# Loss helpers
# ----------------------------------------------------------------------------
def hinge_d_loss(logits_real, logits_fake):
    loss_real = jnp.mean(jax.nn.relu(1.0 - logits_real))
    loss_fake = jnp.mean(jax.nn.relu(1.0 + logits_fake))
    return 0.5 * (loss_real + loss_fake)


def vanilla_d_loss(logits_real, logits_fake):
    return 0.5 * (jnp.mean(jax.nn.softplus(-logits_real)) +
                  jnp.mean(jax.nn.softplus(logits_fake)))


def adopt_weight(weight, global_step, threshold=0, value=0.0):
    return weight if global_step >= threshold else value


class DiagonalGaussianDistribution:
    def __init__(self, parameters):
        self.parameters = parameters
        mean, logvar = jnp.split(parameters, 2, axis=1)
        self.mean = mean.astype(jnp.float32)
        self.logvar = jnp.clip(logvar.astype(jnp.float32), -30.0, 20.0)

    def kl(self):
        b = self.mean.shape[0]
        kl_per = pl.pallas_call(
            _kl_kernel,
            out_shape=jax.ShapeDtypeStruct((b, 1), jnp.float32),
            in_specs=[pl.BlockSpec(memory_space=_VMEM)] * 2,
            out_specs=pl.BlockSpec(memory_space=_VMEM),
        )(self.mean, self.logvar)
        return kl_per[:, 0]


# ----------------------------------------------------------------------------
# LPAPSWithDiscriminator
# ----------------------------------------------------------------------------
class LPAPSWithDiscriminator:
    def __init__(self, disc_start, logvar_init=0.0, kl_weight=1.0, pixelloss_weight=1.0,
                 disc_num_layers=3, disc_in_channels=3, disc_factor=1.0, disc_weight=1.0,
                 perceptual_weight=0.0, use_actnorm=False, disc_conditional=False,
                 disc_loss="hinge", pad_value=-1, ndf=64, key=None):
        assert disc_loss in ("hinge", "vanilla")
        assert not use_actnorm  # TODO(synk): ActNorm variant not implemented; BatchNorm path only.
        # TODO(synk): LPAPS perceptual loss needs pretrained vggishish weights; only the
        # perceptual_weight == 0 configuration is reproduced (p_loss = 0 path).
        assert perceptual_weight == 0.0
        self.pad_val = pad_value
        self.kl_weight = kl_weight
        self.pixel_weight = pixelloss_weight
        self.perceptual_weight = perceptual_weight
        self.logvar = jnp.asarray(logvar_init, jnp.float32)
        self.disc_params = init_nlayer_discriminator_params(
            key if key is not None else jax.random.PRNGKey(0),
            input_nc=disc_in_channels, ndf=ndf, n_layers=disc_num_layers)
        self.discriminator_iter_start = disc_start
        self.disc_loss = hinge_d_loss if disc_loss == "hinge" else vanilla_d_loss
        self.disc_factor = disc_factor
        self.discriminator_weight = disc_weight
        self.disc_conditional = disc_conditional

    def __call__(self, inputs, reconstructions, posteriors, optimizer_idx, global_step,
                 last_layer=None, cond=None, split="train", weights=None):
        if inputs.ndim == 3:
            inputs = inputs[:, None]
            reconstructions = reconstructions[:, None]
        b, c, h, w = inputs.shape
        inputs = inputs.astype(jnp.float32)
        reconstructions = reconstructions.astype(jnp.float32)

        # --- fused row-tiled reduction: sum|x - xrec| (per-b) and per-(b, w) column sums ---
        ch = c * h
        tr = min(512, _round_up(ch, 8))
        chp = _round_up(ch, tr)
        x_r = jnp.reshape(inputs, (b, ch, w))
        xr_r = jnp.reshape(reconstructions, (b, ch, w))
        if chp != ch:
            x_r = jnp.pad(x_r, ((0, 0), (0, chp - ch), (0, 0)))
            xr_r = jnp.pad(xr_r, ((0, 0), (0, chp - ch), (0, 0)))
        rec_part, colsum3 = pl.pallas_call(
            _rec_colsum_kernel,
            out_shape=(jax.ShapeDtypeStruct((b, 1, 1), jnp.float32),
                       jax.ShapeDtypeStruct((b, 1, w), jnp.float32)),
            grid_spec=pltpu.PrefetchScalarGridSpec(
                num_scalar_prefetch=0, grid=(b, chp // tr),
                in_specs=[pl.BlockSpec((1, tr, w), lambda bi, ti: (bi, ti, 0)),
                          pl.BlockSpec((1, tr, w), lambda bi, ti: (bi, ti, 0))],
                out_specs=(pl.BlockSpec((1, 1, 1), lambda bi, ti: (bi, 0, 0)),
                           pl.BlockSpec((1, 1, w), lambda bi, ti: (bi, 0, 0)))),
            compiler_params=pltpu.CompilerParams(
                dimension_semantics=("parallel", "arbitrary")),
        )(x_r, xr_r)
        rec_sum = jnp.sum(rec_part)
        colsum = colsum3[:, 0, :]

        numel = b * c * h * w
        rec_loss_mean = rec_sum / numel
        # nll = |x - xrec| / exp(logvar) + logvar elementwise, so its sum folds to:
        nll_sum = rec_sum / jnp.exp(self.logvar) + self.logvar * numel
        nll_loss = nll_sum / b
        if weights is not None:
            # TODO(synk): only scalar `weights` supported (per-element weights would require
            # materializing the elementwise nll map).
            weighted_nll_loss = (weights * nll_sum) / b
        else:
            weighted_nll_loss = nll_loss

        # --- KL ---
        kl_per = posteriors.kl()
        kl_loss = jnp.sum(kl_per) / kl_per.shape[0]

        # --- sequence mask on reconstructions (masked copy emitted in bf16 for the disc) ---
        colmean = colsum / ch
        x_lengths = jnp.sum((colmean > self.pad_val).astype(jnp.int32), axis=-1)  # (b,)
        rec_masked = pl.pallas_call(
            functools.partial(_mask_kernel, pad_val=float(self.pad_val)),
            out_shape=jax.ShapeDtypeStruct((b, c, h, w), jnp.bfloat16),
            grid_spec=pltpu.PrefetchScalarGridSpec(
                num_scalar_prefetch=1, grid=(b,),
                in_specs=[pl.BlockSpec((1, c, h, w), lambda bi, lens: (bi, 0, 0, 0))],
                out_specs=pl.BlockSpec((1, c, h, w), lambda bi, lens: (bi, 0, 0, 0))),
            compiler_params=pltpu.CompilerParams(dimension_semantics=("parallel",)),
        )(x_lengths, reconstructions)

        # Single NCHW -> NHWC transpose at the discriminator input; channel-last after that.
        # TODO(synk): could be fused into the mask kernel; near-free for c == 1.
        rec_nhwc = jnp.transpose(rec_masked, (0, 2, 3, 1))

        if optimizer_idx == 0:
            if cond is None:
                assert not self.disc_conditional
                disc_in = rec_nhwc
            else:
                assert self.disc_conditional
                cond_nhwc = jnp.transpose(cond.astype(jnp.float32), (0, 2, 3, 1)).astype(jnp.bfloat16)
                disc_in = jnp.concatenate([rec_nhwc, cond_nhwc], axis=-1)
            logits_fake = nlayer_discriminator(disc_in, self.disc_params, num_streams=1)
            g_loss = -jnp.mean(logits_fake)
            # TODO(synk): adaptive d_weight requires autograd through the external decoder
            # `last_layer` graph; reproducing the eval / RuntimeError fallback (d_weight = 0).
            d_weight = jnp.asarray(0.0, jnp.float32)
            disc_factor = adopt_weight(self.disc_factor, global_step,
                                       threshold=self.discriminator_iter_start)
            loss = weighted_nll_loss + self.kl_weight * kl_loss + d_weight * disc_factor * g_loss
            log = {
                f"{split}/total_loss": loss,
                f"{split}/logvar": self.logvar,
                f"{split}/kl_loss": kl_loss,
                f"{split}/nll_loss": nll_loss,
                f"{split}/rec_loss": rec_loss_mean,
                f"{split}/d_weight": d_weight,
                f"{split}/disc_factor": jnp.asarray(disc_factor, jnp.float32),
                f"{split}/g_loss": g_loss,
            }
            return loss, log

        if optimizer_idx == 1:
            inputs_nhwc = jnp.transpose(inputs, (0, 2, 3, 1)).astype(jnp.bfloat16)
            if cond is None:
                real_in, fake_in = inputs_nhwc, rec_nhwc
            else:
                cond_nhwc = jnp.transpose(cond.astype(jnp.float32), (0, 2, 3, 1)).astype(jnp.bfloat16)
                real_in = jnp.concatenate([inputs_nhwc, cond_nhwc], axis=-1)
                fake_in = jnp.concatenate([rec_nhwc, cond_nhwc], axis=-1)
            # Single discriminator pass over [real; fake] with per-stream BatchNorm stats
            # (matches the PyTorch two-forward semantics at half the fixed cost).
            logits = nlayer_discriminator(jnp.concatenate([real_in, fake_in], axis=0),
                                          self.disc_params, num_streams=2)
            logits_real, logits_fake = logits[:b], logits[b:]
            disc_factor = adopt_weight(self.disc_factor, global_step,
                                       threshold=self.discriminator_iter_start)
            d_loss = disc_factor * self.disc_loss(logits_real, logits_fake)
            log = {
                f"{split}/disc_loss": d_loss,
                f"{split}/logits_real": jnp.mean(logits_real),
                f"{split}/logits_fake": jnp.mean(logits_fake),
            }
            return d_loss, log


# ----------------------------------------------------------------------------
# Demo
# ----------------------------------------------------------------------------
if __name__ == "__main__":
    key = jax.random.PRNGKey(0)
    k_in, k_rec, k_post, k_disc = jax.random.split(key, 4)

    b, c, h, w = 2, 1, 32, 32
    inputs = jax.random.normal(k_in, (b, c, h, w), jnp.float32)
    inputs = inputs.at[:, :, :, 24:].set(-1.0)  # padded tail columns -> x_lengths = 24
    reconstructions = inputs + 0.1 * jax.random.normal(k_rec, (b, c, h, w), jnp.float32)

    posterior_params = jax.random.normal(k_post, (b, 8, 4, 4), jnp.float32)  # (b, 2*zc, zh, zw)
    posteriors = DiagonalGaussianDistribution(posterior_params)

    loss_module = LPAPSWithDiscriminator(
        disc_start=1, disc_in_channels=1, perceptual_weight=0.0,
        disc_loss="hinge", pad_value=-1, key=k_disc)

    loss_g, log_g = loss_module(inputs, reconstructions, posteriors,
                                optimizer_idx=0, global_step=10)
    loss_d, log_d = loss_module(inputs, reconstructions, posteriors,
                                optimizer_idx=1, global_step=10)

    jax.block_until_ready((loss_g, loss_d, log_g, log_d))
    print("KERNEL_OK")
</pallas_src>

<mosaic_0001>
module attributes {stable_mosaic.version = 11 : i64} {
  func.func @_rec_colsum_kernel(%arg0: i32, %arg1: i32, %arg2: memref<1x32x32xf32, #tpu.memory_space<vmem>>, %arg3: memref<1x32x32xf32, #tpu.memory_space<vmem>>, %arg4: memref<1x1x1xf32, #tpu.memory_space<vmem>>, %arg5: memref<1x1x32xf32, #tpu.memory_space<vmem>>) attributes {dimension_semantics = [#tpu.dimension_semantics<parallel>, #tpu.dimension_semantics<arbitrary>], iteration_bounds = array<i64: 2, 1>, scalar_prefetch = 0 : i64, scratch_operands = 0 : i64, tpu.core_type = #tpu.core_type<tc>, window_params = [{transform_indices = @transform_0, window_bounds = array<i64: 1, 32, 32>}, {transform_indices = @transform_1, window_bounds = array<i64: 1, 32, 32>}, {transform_indices = @transform_2, window_bounds = array<i64: 1, 1, 1>}, {transform_indices = @transform_3, window_bounds = array<i64: 1, 1, 32>}]} {
    %c0_i32 = arith.constant 0 : i32
    %0 = arith.cmpi eq, %arg1, %c0_i32 : i32
    %1 = arith.extui %0 : i1 to i32
    %c0_i32_0 = arith.constant 0 : i32
    %2 = arith.cmpi ne, %1, %c0_i32_0 : i32
    scf.if %2 {
      %cst_19 = arith.constant 0.000000e+00 : f32
      %20 = vector.broadcast %cst_19 : f32 to vector<1x1x1xf32>
      %c0_20 = arith.constant 0 : index
      %c0_21 = arith.constant 0 : index
      %c0_22 = arith.constant 0 : index
      %21 = vector.load %arg4[%c0_20, %c0_21, %c0_22] : memref<1x1x1xf32, #tpu.memory_space<vmem>>, vector<1x1x1xf32>
      tpu.vector_store %arg4[%c0_20, %c0_21, %c0_22], %20 {strides = array<i32>} : memref<1x1x1xf32, #tpu.memory_space<vmem>>, vector<1x1x1xf32>,
      %cst_23 = arith.constant 0.000000e+00 : f32
      %22 = vector.broadcast %cst_23 : f32 to vector<1x1x32xf32>
      %c0_24 = arith.constant 0 : index
      %c0_25 = arith.constant 0 : index
      %c0_26 = arith.constant 0 : index
      %23 = vector.load %arg5[%c0_24, %c0_25, %c0_26] : memref<1x1x32xf32, #tpu.memory_space<vmem>>, vector<1x1x32xf32>
      tpu.vector_store %arg5[%c0_24, %c0_25, %c0_26], %22 {strides = array<i32>} : memref<1x1x32xf32, #tpu.memory_space<vmem>>, vector<1x1x32xf32>,
    } else {
    }
    %c0 = arith.constant 0 : index
    %c0_1 = arith.constant 0 : index
    %c0_2 = arith.constant 0 : index
    %3 = vector.load %arg2[%c0, %c0_1, %c0_2] : memref<1x32x32xf32, #tpu.memory_space<vmem>>, vector<1x32x32xf32>
    %c0_3 = arith.constant 0 : index
    %c0_4 = arith.constant 0 : index
    %c0_5 = arith.constant 0 : index
    %4 = vector.load %arg3[%c0_3, %c0_4, %c0_5] : memref<1x32x32xf32, #tpu.memory_space<vmem>>, vector<1x32x32xf32>
    %5 = arith.subf %3, %4 : vector<1x32x32xf32>
    %6 = math.absf %5 : vector<1x32x32xf32>
    %c0_6 = arith.constant 0 : index
    %c0_7 = arith.constant 0 : index
    %c0_8 = arith.constant 0 : index
    %7 = vector.load %arg4[%c0_6, %c0_7, %c0_8] : memref<1x1x1xf32, #tpu.memory_space<vmem>>, vector<1x1x1xf32>
    %8 = vector.shape_cast %6 : vector<1x32x32xf32> to vector<1x1x32x32xf32>
    %cst = arith.constant dense<0.000000e+00> : vector<1xf32>
    %9 = vector.multi_reduction <add>, %8, %cst [1, 2, 3] : vector<1x1x32x32xf32> to vector<1xf32>
    %10 = vector.shape_cast %9 : vector<1xf32> to vector<1x1x1x1xf32>
    %11 = vector.extract %10[0, 0, 0, 0] : f32 from vector<1x1x1x1xf32>
    %12 = vector.broadcast %11 : f32 to vector<1x1x1xf32>
    %13 = arith.addf %7, %12 : vector<1x1x1xf32>
    %c0_9 = arith.constant 0 : index
    %c0_10 = arith.constant 0 : index
    %c0_11 = arith.constant 0 : index
    %14 = vector.load %arg4[%c0_9, %c0_10, %c0_11] : memref<1x1x1xf32, #tpu.memory_space<vmem>>, vector<1x1x1xf32>
    tpu.vector_store %arg4[%c0_9, %c0_10, %c0_11], %13 {strides = array<i32>} : memref<1x1x1xf32, #tpu.memory_space<vmem>>, vector<1x1x1xf32>,
    %c0_12 = arith.constant 0 : index
    %c0_13 = arith.constant 0 : index
    %c0_14 = arith.constant 0 : index
    %15 = vector.load %arg5[%c0_12, %c0_13, %c0_14] : memref<1x1x32xf32, #tpu.memory_space<vmem>>, vector<1x1x32xf32>
    %cst_15 = arith.constant dense<0.000000e+00> : vector<1x32xf32>
    %16 = vector.multi_reduction <add>, %3, %cst_15 [1] : vector<1x32x32xf32> to vector<1x32xf32>
    %17 = vector.shape_cast %16 : vector<1x32xf32> to vector<1x1x32xf32>
    %18 = arith.addf %15, %17 : vector<1x1x32xf32>
    %c0_16 = arith.constant 0 : index
    %c0_17 = arith.constant 0 : index
    %c0_18 = arith.constant 0 : index
    %19 = vector.load %arg5[%c0_16, %c0_17, %c0_18] : memref<1x1x32xf32, #tpu.memory_space<vmem>>, vector<1x1x32xf32>
    tpu.vector_store %arg5[%c0_16, %c0_17, %c0_18], %18 {strides = array<i32>} : memref<1x1x32xf32, #tpu.memory_space<vmem>>, vector<1x1x32xf32>,
    return
  }
  func.func @transform_0(%arg0: i32, %arg1: i32) -> (i32, i32, i32) {
    %c0_i32 = arith.constant 0 : i32
    %c0_i32_0 = arith.constant 0 : i32
    return %arg0, %arg1, %c0_i32 : i32, i32, i32
  }
  func.func @transform_1(%arg0: i32, %arg1: i32) -> (i32, i32, i32) {
    %c0_i32 = arith.constant 0 : i32
    %c0_i32_0 = arith.constant 0 : i32
    return %arg0, %arg1, %c0_i32 : i32, i32, i32
  }
  func.func @transform_2(%arg0: i32, %arg1: i32) -> (i32, i32, i32) {
    %c0_i32 = arith.constant 0 : i32
    %c0_i32_0 = arith.constant 0 : i32
    %c0_i32_1 = arith.constant 0 : i32
    return %arg0, %c0_i32, %c0_i32_0 : i32, i32, i32
  }
  func.func @transform_3(%arg0: i32, %arg1: i32) -> (i32, i32, i32) {
    %c0_i32 = arith.constant 0 : i32
    %c0_i32_0 = arith.constant 0 : i32
    %c0_i32_1 = arith.constant 0 : i32
    return %arg0, %c0_i32, %c0_i32_0 : i32, i32, i32
  }
}

</mosaic_0001>

<llo_original>
// kernel: tpu_custom_call.1
$region0: #{tpu_custom_call.1}
  #allocation0 [shape = 'u32[]', space=smem, size = 0x4, offset = 0x4, fixed_abs, tag = 'smem constant byte address 0x4 - core index']
  #allocation1 [shape = 'u32[144,128]{1,0:T(1,128)}', space=vmem, size = 0x12000, scoped, tag = 'internal scratch']
  %s0 = inlined_call_operand.hbm [shape: f32[2,32,32], index: 0, kind: input, shape index: {}]
  %s1 = inlined_call_operand.hbm [shape: f32[2,32,32], index: 1, kind: input, shape index: {}]
  %s2 = inlined_call_operand.vmem [shape: f32[2,1,1], index: 2, kind: output, shape index: {0}]
  %s3 = inlined_call_operand.hbm [shape: f32[2,1,32], index: 3, kind: output, shape index: {1}]
  %4 = xla_tuple %s2, %s3
  %s5 = sld [smem:[#allocation0]]
  $region61: #{tpu_custom_call.1} parent=0
    _
  %s7 = ssub.s32 1, %s5
  %s8 = scalar_select 0, %s7, %s5
  $region1: #{tpu_custom_call.1} parent=0
    #allocation2 [shape = 'u8[32768]{0}', space=vmem, size = 0x8000, scoped, tag = 'input window, operand 0']
    #allocation3 [shape = 's32[2]{0}', space=sflag, size = 0x8, scoped, tag = 'scoped memory for tpu_custom_call.1']
    #allocation4 [shape = 's32[2]{0}', space=sflag, size = 0x8, scoped, tag = 'scoped memory for tpu_custom_call.1']
    #allocation5 [shape = 'u8[32768]{0}', space=vmem, size = 0x8000, scoped, tag = 'input window, operand 1']
    #allocation6 [shape = 's32[2]{0}', space=sflag, size = 0x8, scoped, tag = 'scoped memory for tpu_custom_call.1']
    #allocation7 [shape = 'u8[1024]{0}', space=vmem, size = 0x400, scoped, tag = 'output window, operand 1']
    %9 = vsyncpa [#allocation3], 0
    %s10 = scalar_lea.sflag [#allocation3], 1
    %11 = vsyncpa %s10, 0
    %12 = vsyncpa [#allocation6], 0
    %s13 = scalar_lea.sflag [#allocation6], 1
    %14 = vsyncpa %s13, 0
    %15 = vsyncpa [#allocation4], 0
    %s16 = scalar_lea.sflag [#allocation4], 1
    %17 = vsyncpa %s16, 0
    loop: start=0, step=1, limit=4
    $region2: #{tpu_custom_call.1} parent=1 // loop_pre_header
      _
    $region3: #{tpu_custom_call.1} parent=1 // loop_header
      %s19 = sphi 0, %s23
      %p20 = scmp.ge.s32.totalorder %s19, 4
      %s26 = sphi 0, %s38
      %s27 = sphi 0, %s34
      %s28 = sphi 0, %s26
      %s29 = sphi 0, %s27
      %s30 = sphi 0, %s28
      %s31 = sphi 0, %s29
      %s43 = sphi 0, %s45
      %s46 = sphi 0, %s43
      %s47 = sphi 0, %s46
      %s63 = sphi 0, %s47
      %s71 = sphi 0, %s73
      %s74 = sphi 0, %s71
      %s75 = sphi 0, %s74
      %s91 = sphi 0, %s75
      %s97 = sphi 0, %s99
      %s100 = sphi 0, %s97
      %s101 = sphi 0, %s100
      %s117 = sphi 0, %s101
      %s123 = sphi 0, %s125
      %s126 = sphi 0, %s123
      %s127 = sphi 0, %s126
      %s143 = sphi 0, %s127
    $region4: #{tpu_custom_call.1} parent=1 // loop_header_branch
      %22 = sbr.rel (%p20) target = $region8
    $region5: #{tpu_custom_call.1} parent=1 // loop_body
      %s24 = ssub.s32 %s19, 1
      %s25 = ssub.s32 %s19, 2
      %s32 = sadd.s32 1, %s27
      %p33 = scmp.ge.s32.totalorder %s32, 1
      %s34 = scalar_select %p33, 0, %s32
      %s35 = sadd.s32 1, %s26
      %s36 = scalar_select %p33, %s35, %s26
      %p37 = scmp.ge.s32.totalorder %s36, 2
      %s38 = scalar_select %p37, 0, %s36
      %s39 = ssub.s32 %s26, %s38
      %s40 = ssub.s32 %s27, %s34
      %s41 = sor.u32 %s39, %s40
      %p42 = scmp.eq.s32.totalorder %s41, 0
      %s44 = sadd.s32 %s43, 1
      %s45 = scalar_select %p42, %s43, %s44
      %p48 = pneg %p42
      %p49 = scmp.eq.s32.totalorder %s19, 1
      %p50 = por %p48, %p49
      %p51 = scmp.ne.s32.totalorder %s43, %s46
      %p52 = scmp.eq.s32.totalorder %s19, 0
      %p53 = por %p51, %p52
      %p54 = scmp.ne.s32.totalorder %s43, %s46
      %p55 = scmp.eq.s32.totalorder %s24, 1
      %p56 = por %p54, %p55
      %p57 = scmp.ne.s32.totalorder %s46, %s47
      %p58 = scmp.eq.s32.totalorder %s24, 0
      %p59 = por %p57, %p58
      %p60 = scmp.ne.s32.totalorder %s46, %s47
      %p61 = scmp.eq.s32.totalorder %s25, 1
      %p62 = por %p60, %p61
      %p64 = scmp.ne.s32.totalorder %s47, %s63
      %p65 = scmp.eq.s32.totalorder %s25, 0
      %p66 = por %p64, %p65
      %s67 = ssub.s32 %s26, %s38
      %s68 = ssub.s32 %s27, %s34
      %s69 = sor.u32 %s67, %s68
      %p70 = scmp.eq.s32.totalorder %s69, 0
      %s72 = sadd.s32 %s71, 1
      %s73 = scalar_select %p70, %s71, %s72
      %p76 = pneg %p70
      %p77 = scmp.eq.s32.totalorder %s19, 1
      %p78 = por %p76, %p77
      %p79 = scmp.ne.s32.totalorder %s71, %s74
      %p80 = scmp.eq.s32.totalorder %s19, 0
      %p81 = por %p79, %p80
      %p82 = scmp.ne.s32.totalorder %s71, %s74
      %p83 = scmp.eq.s32.totalorder %s24, 1
      %p84 = por %p82, %p83
      %p85 = scmp.ne.s32.totalorder %s74, %s75
      %p86 = scmp.eq.s32.totalorder %s24, 0
      %p87 = por %p85, %p86
      %p88 = scmp.ne.s32.totalorder %s74, %s75
      %p89 = scmp.eq.s32.totalorder %s25, 1
      %p90 = por %p88, %p89
      %p92 = scmp.ne.s32.totalorder %s75, %s91
      %p93 = scmp.eq.s32.totalorder %s25, 0
      %p94 = por %p92, %p93
      %s95 = ssub.s32 %s26, %s38
      %p96 = scmp.eq.s32.totalorder %s95, 0
      %s98 = sadd.s32 %s97, 1
      %s99 = scalar_select %p96, %s97, %s98
      %p102 = pneg %p96
      %p103 = scmp.eq.s32.totalorder %s19, 1
      %p104 = por %p102, %p103
      %p105 = scmp.ne.s32.totalorder %s97, %s100
      %p106 = scmp.eq.s32.totalorder %s19, 0
      %p107 = por %p105, %p106
      %p108 = scmp.ne.s32.totalorder %s97, %s100
      %p109 = scmp.eq.s32.totalorder %s24, 1
      %p110 = por %p108, %p109
      %p111 = scmp.ne.s32.totalorder %s100, %s101
      %p112 = scmp.eq.s32.totalorder %s24, 0
      %p113 = por %p111, %p112
      %p114 = scmp.ne.s32.totalorder %s100, %s101
      %p115 = scmp.eq.s32.totalorder %s25, 1
      %p116 = por %p114, %p115
      %p118 = scmp.ne.s32.totalorder %s101, %s117
      %p119 = scmp.eq.s32.totalorder %s25, 0
      %p120 = por %p118, %p119
      %s121 = ssub.s32 %s26, %s38
      %p122 = scmp.eq.s32.totalorder %s121, 0
      %s124 = sadd.s32 %s123, 1
      %s125 = scalar_select %p122, %s123, %s124
      %p128 = pneg %p122
      %p129 = scmp.eq.s32.totalorder %s19, 1
      %p130 = por %p128, %p129
      %p131 = scmp.ne.s32.totalorder %s123, %s126
      %p132 = scmp.eq.s32.totalorder %s19, 0
      %p133 = por %p131, %p132
      %p134 = scmp.ne.s32.totalorder %s123, %s126
      %p135 = scmp.eq.s32.totalorder %s24, 1
      %p136 = por %p134, %p135
      %p137 = scmp.ne.s32.totalorder %s126, %s127
      %p138 = scmp.eq.s32.totalorder %s24, 0
      %p139 = por %p137, %p138
      %p140 = scmp.ne.s32.totalorder %s126, %s127
      %p141 = scmp.eq.s32.totalorder %s25, 1
      %p142 = por %p140, %p141
      %p144 = scmp.ne.s32.totalorder %s127, %s143
      %p145 = scmp.eq.s32.totalorder %s25, 0
      %p146 = por %p144, %p145
      %p147 = scmp.le.s32.totalorder 1, %s19
      %p148 = scmp.lt.s32.totalorder %s19, 3
      %p149 = pnand %p147, %p148
      %p150 = pneg %p149
      // Predicated region
      $region9: #{tpu_custom_call.1} parent=5 // pred_check
        _
      $region10: #{tpu_custom_call.1} parent=5 // pred_check_branch
        %152 = sbr.rel (%p149) target = $region12
      $region11: #{tpu_custom_call.1} parent=5 // pred_region
        %s153 = ssub.s32 %s19, 1
      $region12: #{tpu_custom_call.1} parent=5 // pred_fallthru
        _
      %p154 = scmp.lt.s32.totalorder %s19, 2
      // Predicated region
      $region13: #{tpu_custom_call.1} parent=5 // pred_check
        %p155 = pneg %p154
      $region14: #{tpu_custom_call.1} parent=5 // pred_check_branch
        %157 = sbr.rel (%p155) target = $region16
      $region15: #{tpu_custom_call.1} parent=5 // pred_region
        // Predicated region
        $region17: #{tpu_custom_call.1} parent=15 // pred_check
          %p158 = pneg %p53
        $region18: #{tpu_custom_call.1} parent=15 // pred_check_branch
          %160 = sbr.rel (%p158) target = $region20
        $region19: #{tpu_custom_call.1} parent=15 // pred_region
          %s161 = sand.u32 %s43, 1
          %s162 = scalar_lea.sflag [#allocation3], %s161
          %s163 = sand.u32 %s43, 1
          %s164 = smul.addr %s163, 32
          %s165 = scalar_lea.vmem [#allocation2], %s164
          %s166 = smul.u32 4, %s27
          %s168 = ssub.s32 512, 512
          %169 = vsyncadd %s162, %s168
          %s170 = smul.addr %s26, 4
          %s171 = sadd.s32 %s166, %s170
          %s172 = smul.addr %s171, 128
          %s173 = scalar_lea.hbm %s0, %s172
          %s174 = sshll.u32 %s165, 4
          %s175 = int_to_ptr.vmem [resolvable:$true] %s174
          %180 = dma.hbm_to_vmem [thread:$0]  %s173, 512, %s175, %s162, 128, 128, 8
        $region20: #{tpu_custom_call.1} parent=15 // pred_fallthru
          _
        // Predicated region
        $region21: #{tpu_custom_call.1} parent=15 // pred_check
          %p181 = pneg %p81
        $region22: #{tpu_custom_call.1} parent=15 // pred_check_branch
          %183 = sbr.rel (%p181) target = $region24
        $region23: #{tpu_custom_call.1} parent=15 // pred_region
          %s184 = sand.u32 %s71, 1
          %s185 = scalar_lea.sflag [#allocation6], %s184
          %s186 = sand.u32 %s71, 1
          %s187 = smul.addr %s186, 32
          %s188 = scalar_lea.vmem [#allocation5], %s187
          %s189 = smul.u32 4, %s27
          %s191 = ssub.s32 512, 512
          %192 = vsyncadd %s185, %s191
          %s193 = smul.addr %s26, 4
          %s194 = sadd.s32 %s189, %s193
          %s195 = smul.addr %s194, 128
          %s196 = scalar_lea.hbm %s1, %s195
          %s197 = sshll.u32 %s188, 4
          %s198 = int_to_ptr.vmem [resolvable:$true] %s197
          %203 = dma.hbm_to_vmem [thread:$0]  %s196, 512, %s198, %s185, 128, 128, 8
        $region24: #{tpu_custom_call.1} parent=15 // pred_fallthru
          _
      $region16: #{tpu_custom_call.1} parent=5 // pred_fallthru
        _
      %p204 = scmp.le.s32.totalorder 1, %s19
      %p205 = scmp.lt.s32.totalorder %s19, 3
      %p206 = pnand %p204, %p205
      %p207 = pneg %p206
      // Predicated region
      $region25: #{tpu_custom_call.1} parent=5 // pred_check
        _
      $region26: #{tpu_custom_call.1} parent=5 // pred_check_branch
        %209 = sbr.rel (%p206) target = $region28
      $region27: #{tpu_custom_call.1} parent=5 // pred_region
        %s210 = ssub.s32 %s19, 1
        %s211 = sand.u32 %s46, 1
        %s212 = scalar_lea.sflag [#allocation3], %s211
        %s213 = sand.u32 %s46, 1
        %s214 = smul.addr %s213, 32
        %s215 = scalar_lea.vmem [#allocation2], %s214
        // Predicated region
        $region29: #{tpu_custom_call.1} parent=27 // pred_check
          %p216 = pneg %p59
        $region30: #{tpu_custom_call.1} parent=27 // pred_check_branch
          %218 = sbr.rel (%p216) target = $region32
        $region31: #{tpu_custom_call.1} parent=27 // pred_region
          %219 = dma.done %s212, 512
        $region32: #{tpu_custom_call.1} parent=27 // pred_fallthru
          _
        %s220 = sand.u32 %s74, 1
        %s221 = scalar_lea.sflag [#allocation6], %s220
        %s222 = sand.u32 %s74, 1
        %s223 = smul.addr %s222, 32
        %s224 = scalar_lea.vmem [#allocation5], %s223
        // Predicated region
        $region33: #{tpu_custom_call.1} parent=27 // pred_check
          %p225 = pneg %p87
        $region34: #{tpu_custom_call.1} parent=27 // pred_check_branch
          %227 = sbr.rel (%p225) target = $region36
        $region35: #{tpu_custom_call.1} parent=27 // pred_region
          %228 = dma.done %s221, 512
        $region36: #{tpu_custom_call.1} parent=27 // pred_fallthru
          _
        %s229 = sand.u32 %s46, 1
        %s230 = scalar_lea.sflag [#allocation3], %s229
        %s231 = sand.u32 %s46, 1
        %s232 = smul.addr %s231, 32
        %s233 = scalar_lea.vmem [#allocation2], %s232
        %p234 = pneg %p59
        %p235 = pneg %p56
        %s236 = sand.u32 %s74, 1
        %s237 = scalar_lea.sflag [#allocation6], %s236
        %s238 = sand.u32 %s74, 1
        %s239 = smul.addr %s238, 32
        %s240 = scalar_lea.vmem [#allocation5], %s239
        %p241 = pneg %p87
        %p242 = pneg %p84
        %p243 = pneg %p113
        %p244 = pneg %p110
        %p245 = scmp.lt.s32.totalorder %s28, 1
        %s246 = scalar_select %p245, %s28, 1
        %s247 = scalar_lea.vmem %s2, %s246
        %p248 = pneg %p139
        %p249 = pneg %p136
        %s250 = sand.u32 %s126, 1
        %s251 = scalar_lea.sflag [#allocation4], %s250
        %s252 = sand.u32 %s126, 1
        %s253 = scalar_lea.vmem [#allocation7], %s252
        %s254 = smul.u32 4, %s29
        %s255 = smul.u32 4, %s29
        %p256 = scmp.lt.s32.totalorder %s28, 1
        %s257 = scalar_select %p256, %s28, 1
        %s258 = scalar_lea.vmem %s2, %s257
        %p259 = scmp.eq.s32.totalorder %s29, 0
        // Predicated region
        $region37: #{tpu_custom_call.1} parent=27 // pred_check
          %p260 = pneg %p259
        $region38: #{tpu_custom_call.1} parent=27 // pred_check_branch
          %262 = sbr.rel (%p260) target = $region40
        $region39: #{tpu_custom_call.1} parent=27 // pred_region
          %vm263 = vcmask 0
          %264 = vst.msk [vmem:[%s258] sm:$0x1] %vm263, 0.0
          %vm265 = vcmask 253952
          %266 = vst.msk [vmem:[%s253] sm:$0x1] %vm265, 0.0
        $region40: #{tpu_custom_call.1} parent=27 // pred_fallthru
          _
        %v267 = vld [vmem:[%s215] sm:$0xff]
        %v268 = vld [vmem:[%s215 + $0x8] sm:$0xff]
        %v269 = vld [vmem:[%s215 + $0x10] sm:$0xff]
        %v270 = vld [vmem:[%s215 + $0x18] sm:$0xff]
        %v271 = vld [vmem:[%s224] sm:$0xff]
        %v272 = vld [vmem:[%s224 + $0x8] sm:$0xff]
        %v273 = vld [vmem:[%s224 + $0x10] sm:$0xff]
        %v274 = vld [vmem:[%s224 + $0x18] sm:$0xff]
        %v275 = vsub.f32 %v267, %v271
        %v276 = vsub.f32 %v268, %v272
        %v277 = vsub.f32 %v269, %v273
        %v278 = vsub.f32 %v270, %v274
        %v279 = vand.u32 2147483647, %v275
        %v280 = vand.u32 2147483647, %v276
        %v281 = vand.u32 2147483647, %v277
        %v282 = vand.u32 2147483647, %v278
        %v283 = vld [vmem:[%s258] sm:$0x1]
        %vm284 = vcmask 261120
        %v285 = vsel %vm284, %v279, 0.0
        %v286 = vsel %vm284, %v280, 0.0
        %v287 = vadd.f32 %v285, %v286
        %v288 = vsel %vm284, %v281, 0.0
        %v289 = vadd.f32 %v287, %v288
        %v290 = vsel %vm284, %v282, 0.0
        %v291 = vadd.f32 %v289, %v290
        %292 = vadd.xlane.f32.xlu0 %v291
        %v293 = vpop.xlane.xlu0 %292
        %v294 = vrot.slane %v293, 4
        %v295 = vadd.f32 %v293, %v294
        %v296 = vrot.slane %v295, 2
        %v297 = vadd.f32 %v295, %v296
        %v298 = vrot.slane %v297, 1
        %v299 = vadd.f32 %v297, %v298
        %s300 = vtos %v299
        %v301 = vstv %s300
        %v302 = vadd.f32 %v283, %v301
        %vm303 = vcmask 0
        %304 = vst.msk [vmem:[%s258] sm:$0x1] %vm303, %v302
        %v305 = vld [vmem:[%s253] sm:$0x1]
        %v306 = vsel %vm284, %v267, 0.0
        %v307 = vsel %vm284, %v268, 0.0
        %v308 = vadd.f32 %v306, %v307
        %v309 = vsel %vm284, %v269, 0.0
        %v310 = vadd.f32 %v308, %v309
        %v311 = vsel %vm284, %v270, 0.0
        %v312 = vadd.f32 %v310, %v311
        %v313 = vrot.slane %v312, 4
        %v314 = vadd.f32 %v312, %v313
        %v315 = vrot.slane %v314, 2
        %v316 = vadd.f32 %v314, %v315
        %v317 = vrot.slane %v316, 1
        %v318 = vadd.f32 %v316, %v317
        %v319 = vadd.f32 %v305, %v318
        %vm320 = vcmask 253952
        %321 = vst.msk [vmem:[%s253] sm:$0x1] %vm320, %v319
        %p322 = scmp.lt.s32.totalorder %s28, 1
        %s323 = scalar_select %p322, %s28, 1
        %s324 = scalar_lea.vmem %s2, %s323
        %s325 = sand.u32 %s126, 1
        %s326 = scalar_lea.sflag [#allocation4], %s325
        %s327 = sand.u32 %s126, 1
        %s328 = scalar_lea.vmem [#allocation7], %s327
        // Predicated region
        $region41: #{tpu_custom_call.1} parent=27 // pred_check
          %p329 = pneg %p110
        $region42: #{tpu_custom_call.1} parent=27 // pred_check_branch
          %331 = sbr.rel (%p329) target = $region44
        $region43: #{tpu_custom_call.1} parent=27 // pred_region
          _
        $region44: #{tpu_custom_call.1} parent=27 // pred_fallthru
          _
        // Predicated region
        $region45: #{tpu_custom_call.1} parent=27 // pred_check
          %p332 = pneg %p136
        $region46: #{tpu_custom_call.1} parent=27 // pred_check_branch
          %334 = sbr.rel (%p332) target = $region48
        $region47: #{tpu_custom_call.1} parent=27 // pred_region
          %s336 = ssub.s32 16, 16
          %337 = vsyncadd %s326, %s336
          %s338 = smul.addr %s28, 16
          %s339 = scalar_lea.hbm %s3, %s338
          %s341 = sshll.u32 %s328, 4
          %s342 = int_to_ptr.vmem [resolvable:$true] %s341
          %344 = dma.vmem_to_hbm [thread:$0]  %s342, 16, %s339, %s326
        $region48: #{tpu_custom_call.1} parent=27 // pred_fallthru
          _
      $region28: #{tpu_custom_call.1} parent=5 // pred_fallthru
        _
      %p345 = scmp.le.s32.totalorder 2, %s19
      // Predicated region
      $region49: #{tpu_custom_call.1} parent=5 // pred_check
        %p346 = pneg %p345
      $region50: #{tpu_custom_call.1} parent=5 // pred_check_branch
        %348 = sbr.rel (%p346) target = $region52
      $region51: #{tpu_custom_call.1} parent=5 // pred_region
        %s349 = ssub.s32 %s19, 2
        // Predicated region
        $region53: #{tpu_custom_call.1} parent=51 // pred_check
          %p350 = pneg %p116
        $region54: #{tpu_custom_call.1} parent=51 // pred_check_branch
          %352 = sbr.rel (%p350) target = $region56
        $region55: #{tpu_custom_call.1} parent=51 // pred_region
          %p353 = scmp.lt.s32.totalorder %s30, 1
          %s354 = scalar_select %p353, %s30, 1
          %s355 = scalar_lea.vmem %s2, %s354
        $region56: #{tpu_custom_call.1} parent=51 // pred_fallthru
          _
        // Predicated region
        $region57: #{tpu_custom_call.1} parent=51 // pred_check
          %p356 = pneg %p142
        $region58: #{tpu_custom_call.1} parent=51 // pred_check_branch
          %358 = sbr.rel (%p356) target = $region60
        $region59: #{tpu_custom_call.1} parent=51 // pred_region
          %s359 = sand.u32 %s127, 1
          %s360 = scalar_lea.sflag [#allocation4], %s359
          %s361 = sand.u32 %s127, 1
          %s362 = scalar_lea.vmem [#allocation7], %s361
          %363 = dma.done %s360, 16
        $region60: #{tpu_custom_call.1} parent=51 // pred_fallthru
          _
      $region52: #{tpu_custom_call.1} parent=5 // pred_fallthru
        _
    $region6: #{tpu_custom_call.1} parent=1 // loop_footer
      %s23 = sadd.s32 1, %s19
    $region7: #{tpu_custom_call.1} parent=1 // loop_footer_branch
      %18 = sbr.rel target = $region3
    $region8: #{tpu_custom_call.1} parent=1 // loop_exit
      _
    %364 = vsyncpa [#allocation3], 1
    %s365 = scalar_lea.sflag [#allocation3], 1
    %366 = vsyncpa %s365, 1
    %367 = vsyncpa [#allocation6], 1
    %s368 = scalar_lea.sflag [#allocation6], 1
    %369 = vsyncpa %s368, 1
    %370 = vsyncpa [#allocation4], 1
    %s371 = scalar_lea.sflag [#allocation4], 1
    %372 = vsyncpa %s371, 1

</llo_original>
